<compile_context>
chip_gen: v6e
topology: v6e:2x2x1
jax: 0.10.0
libtpu: 0.0.40
codegen_flags: <defaults>
</compile_context>

<pallas_src>
import functools

import jax
import jax.numpy as jnp
import numpy as np
from jax import lax
from jax.experimental import pallas as pl
from jax.experimental.pallas import tpu as pltpu

NEG_INF = -1e30


# --------------------------------------------------------------------------- kernel A
def feature_kernel(x_ref, w_gat_ref, h_ref):
    # h = x @ W_gat   (GATConv shared linear transform), one row tile per grid step.
    h_ref[...] = jnp.dot(x_ref[...], w_gat_ref[...], preferred_element_type=jnp.float32)


# --------------------------------------------------------------------------- kernel B
def gat_attention_kernel(adj_ref, h_ref, att_src_t_ref, att_dst_bd_ref, bias_ref,
                         w_score_ref, x_out_ref, sp_ref, *, n_heads, head_dim, tile_m):
    i = pl.program_id(0)
    row0 = pl.multiple_of(i * tile_m, tile_m)

    adj = adj_ref[...]                               # [TM, N] bf16 0/1, no self loops
    n_src = adj.shape[1]
    h_all = h_ref[...]                               # [N, HC] f32 (VMEM resident)
    h_rows = h_ref[pl.ds(row0, tile_m), :]           # [TM, HC] rows of this tile

    # Attention-logit pieces for ALL heads at once via MXU (no per-head lane reductions).
    # a_src_t[h, j] = <h[j], att_src_head_h>  (already in row layout -> cheap broadcast below)
    a_src_t = lax.dot_general(att_src_t_ref[...], h_all,
                              (((1,), (1,)), ((), ())),
                              preferred_element_type=jnp.float32)           # [H, N]
    a_dst = jnp.dot(h_rows, att_dst_bd_ref[...],
                    preferred_element_type=jnp.float32)                     # [TM, H]

    # Edge mask for edges j -> i, plus GATConv's added self loops (diagonal), built in-kernel.
    col = lax.broadcasted_iota(jnp.int32, (tile_m, n_src), 1)
    row = lax.broadcasted_iota(jnp.int32, (tile_m, n_src), 0) + row0
    edge_mask = (adj > 0) | (col == row)

    outs = []
    for hh in range(n_heads):
        lo = hh * head_dim
        e = a_dst[:, hh:hh + 1] + a_src_t[hh:hh + 1, :]                     # [TM, N]
        e = jnp.where(e > 0, e, 0.2 * e)                                    # LeakyReLU(0.2)
        e = jnp.where(edge_mask, e, NEG_INF)                                # mask non-edges
        m = jnp.max(e, axis=1, keepdims=True)
        p = jnp.exp(e - m)                                                  # exactly 0 on masked
        att = p / jnp.sum(p, axis=1, keepdims=True)                         # softmax over in-edges
        out_h = jnp.dot(att.astype(jnp.bfloat16),
                        h_all[:, lo:lo + head_dim].astype(jnp.bfloat16),
                        preferred_element_type=jnp.float32)                 # [TM, C]
        outs.append(out_h)

    # Single lane-dense store of the concatenated heads (+ GATConv output bias); value reused below.
    x_out = jnp.concatenate(outs, axis=1) + bias_ref[...]                   # [TM, HC]
    x_out_ref[...] = x_out
    # SAGPooling GraphConv projections fused: col0 = x_out @ w_rel, col1 = x_out @ w_root
    sp_ref[...] = jnp.dot(x_out, w_score_ref[...], preferred_element_type=jnp.float32)  # [TM, 2]


# --------------------------------------------------------------------------- kernel C
def sag_pool_kernel(adj_ref, sp_ref, x_out_ref, onehot_ref, b_rel_ref,
                    emb_ref, m_sc, den_sc, num_sc, *, tile_m):
    i = pl.program_id(0)
    nt = pl.num_programs(0)
    row0 = pl.multiple_of(i * tile_m, tile_m)

    @pl.when(i == 0)
    def _init():
        m_sc[...] = jnp.full_like(m_sc, NEG_INF)
        den_sc[...] = jnp.zeros_like(den_sc)
        num_sc[...] = jnp.zeros_like(num_sc)

    adj = adj_ref[...]                                    # [TM, N] bf16, no self loops
    sr_all = sp_ref[:, 0:1].astype(jnp.bfloat16)          # [N, 1]  x_out @ w_rel (all nodes)
    sroot = sp_ref[pl.ds(row0, tile_m), 1:2]              # [TM, 1] x_out @ w_root (tile rows)

    # GraphConv score (reassociated): score = adj @ (x_out @ w_rel) + x_out @ w_root + b_rel
    score = (jnp.dot(adj, sr_all, preferred_element_type=jnp.float32) + sroot
             + b_rel_ref[...])                            # [TM, 1]

    oh = onehot_ref[...]                                  # [TM, B] node->graph membership
    x_out = x_out_ref[...]                                # [TM, HC]

    # Online per-graph softmax of `score`, fused with the weighted global_add_pool.
    masked = jnp.where(oh > 0, score, NEG_INF)            # [TM, B]
    tmax = jnp.max(masked, axis=0, keepdims=True)         # [1, B] tile-local per-graph max
    m_prev = m_sc[...]
    m_new = jnp.maximum(m_prev, tmax)                     # [1, B]
    scale = jnp.exp(m_prev - m_new)                       # [1, B] rescale old accumulators
    node_max = jnp.sum(oh * m_new, axis=1, keepdims=True)  # [TM, 1] (each node in exactly one graph)
    ex = jnp.exp(score - node_max)                        # [TM, 1]

    den_sc[...] = den_sc[...] * scale + jnp.sum(oh * ex, axis=0, keepdims=True)      # [1, B]
    wx = x_out * ex                                       # [TM, HC]
    # num += onehot^T @ (x_out * ex); kept graph-minor [HC, B] so no in-kernel transposes needed.
    num_sc[...] = num_sc[...] * scale + lax.dot_general(
        wx, oh, (((0,), (0,)), ((), ())), preferred_element_type=jnp.float32)        # [HC, B]
    m_sc[...] = m_new

    @pl.when(i == nt - 1)
    def _finalize():
        den = den_sc[...]
        den = jnp.where(den > 0, den, 1.0)                # guard empty graph slots
        emb_ref[...] = num_sc[...] / den                  # [HC, B]


# --------------------------------------------------------------------------- wrapper
def _compiler_params(semantics, block_bytes):
    need = 2 * int(block_bytes) + (4 << 20)               # double-buffered blocks + headroom
    limit = int(min(64 << 20, max(16 << 20, need)))
    return pltpu.CompilerParams(dimension_semantics=semantics, vmem_limit_bytes=limit)


def gat_block_pallas(x, adj, onehot_t, params, n_heads, head_dim, tile_m=None):
    """adj: [N, N] f32 dense adjacency (adj[i,j]=1 iff edge j->i), no self loops.
    onehot_t: [N, B] node->graph membership. Returns (x_out [N, HC], emb [B, HC])."""
    N, f_in = x.shape
    B = onehot_t.shape[1]
    HC = n_heads * head_dim
    if tile_m is None:
        tile_m = min(N, 256)
    assert N % tile_m == 0, "N must be a multiple of tile_m"
    n_tiles = N // tile_m

    # Host-side derived weights (tiny): block-diagonal per-head attention vectors and fused score W.
    head_id = jnp.arange(HC) // head_dim
    sel = (head_id[None, :] == jnp.arange(n_heads)[:, None]).astype(jnp.float32)     # [H, HC]
    att_src_t = sel * params["att_src"]                                              # [H, HC]
    att_dst_bd = jnp.transpose(sel * params["att_dst"])                              # [HC, H]
    w_score = jnp.concatenate([params["w_rel"], params["w_root"]], axis=1)           # [HC, 2]

    # 0/1 adjacency streamed as bf16 (exact) -> halves the dominant HBM/VMEM N^2 traffic.
    adj_bf16 = adj.astype(jnp.bfloat16)

    # ---- Kernel A: h = x @ W_gat ------------------------------------------------------
    h = pl.pallas_call(
        feature_kernel,
        out_shape=jax.ShapeDtypeStruct((N, HC), jnp.float32),
        grid=(n_tiles,),
        in_specs=[pl.BlockSpec((tile_m, f_in), lambda i: (i, 0)),
                  pl.BlockSpec((f_in, HC), lambda i: (0, 0))],
        out_specs=pl.BlockSpec((tile_m, HC), lambda i: (i, 0)),
        compiler_params=_compiler_params(("parallel",),
                                         4 * (tile_m * f_in + f_in * HC + tile_m * HC)),
    )(x, params["w_gat"])

    # ---- Kernel B: GAT attention + x_out + fused score parts ---------------------------
    blk_b = 2 * tile_m * N + 4 * (N * HC + tile_m * HC + tile_m * 2 + 4 * HC * max(n_heads, 2))
    cost_b = pl.CostEstimate(
        flops=int(n_heads * (2 * N * N * head_dim + 8 * N * N) + 8 * N * HC),
        transcendentals=int(n_heads * N * N),
        bytes_accessed=int(2 * N * N + 8 * N * HC + 8 * N),
    )
    x_out, sp = pl.pallas_call(
        functools.partial(gat_attention_kernel, n_heads=n_heads, head_dim=head_dim, tile_m=tile_m),
        out_shape=(jax.ShapeDtypeStruct((N, HC), jnp.float32),
                   jax.ShapeDtypeStruct((N, 2), jnp.float32)),
        grid=(n_tiles,),
        in_specs=[pl.BlockSpec((tile_m, N), lambda i: (i, 0)),     # adjacency row tile (bf16)
                  pl.BlockSpec((N, HC), lambda i: (0, 0)),         # h (resident)
                  pl.BlockSpec((n_heads, HC), lambda i: (0, 0)),   # att_src (block-diag, row form)
                  pl.BlockSpec((HC, n_heads), lambda i: (0, 0)),   # att_dst (block-diag)
                  pl.BlockSpec((1, HC), lambda i: (0, 0)),         # GATConv bias
                  pl.BlockSpec((HC, 2), lambda i: (0, 0))],        # [w_rel | w_root]
        out_specs=(pl.BlockSpec((tile_m, HC), lambda i: (i, 0)),
                   pl.BlockSpec((tile_m, 2), lambda i: (i, 0))),
        compiler_params=_compiler_params(("parallel",), blk_b),
        cost_estimate=cost_b,
    )(adj_bf16, h, att_src_t, att_dst_bd, params["bias"], w_score)

    # ---- Kernel C: SAGPooling score + per-graph softmax + weighted add pool ------------
    blk_c = 2 * tile_m * N + 4 * (N * 2 + tile_m * HC + tile_m * B + HC * B + 2 * B)
    cost_c = pl.CostEstimate(
        flops=int(2 * N * N + 4 * N * B * (HC + 4)),
        transcendentals=int(2 * N + 2 * B * n_tiles),
        bytes_accessed=int(2 * N * N + 4 * N * (HC + B + 2) + 4 * HC * B),
    )
    emb_t = pl.pallas_call(
        functools.partial(sag_pool_kernel, tile_m=tile_m),
        out_shape=jax.ShapeDtypeStruct((HC, B), jnp.float32),
        grid=(n_tiles,),
        in_specs=[pl.BlockSpec((tile_m, N), lambda i: (i, 0)),     # adjacency row tile (bf16)
                  pl.BlockSpec((N, 2), lambda i: (0, 0)),          # score parts (resident)
                  pl.BlockSpec((tile_m, HC), lambda i: (i, 0)),    # x_out rows
                  pl.BlockSpec((tile_m, B), lambda i: (i, 0)),     # node->graph membership rows
                  pl.BlockSpec((1, 1), lambda i: (0, 0))],         # GraphConv bias
        out_specs=pl.BlockSpec((HC, B), lambda i: (0, 0)),
        scratch_shapes=[pltpu.VMEM((1, B), jnp.float32),           # running per-graph max
                        pltpu.VMEM((1, B), jnp.float32),           # running per-graph denom
                        pltpu.VMEM((HC, B), jnp.float32)],         # running weighted numerator
        compiler_params=_compiler_params(("arbitrary",), blk_c),
        cost_estimate=cost_c,
    )(adj_bf16, sp, x_out, onehot_t, params["b_rel"])

    return x_out, jnp.transpose(emb_t)                             # emb -> [B, HC]


# --------------------------------------------------------------------------- reference
def gat_block_reference(x, adj, onehot_t, params, n_heads, head_dim):
    """Pure-JAX f32 mirror of the PyTorch module semantics (sanity check)."""
    N = x.shape[0]
    onehot = onehot_t.T
    adj_sl = jnp.minimum(adj + jnp.eye(N, dtype=adj.dtype), 1.0)
    h = x @ params["w_gat"]
    outs = []
    for hh in range(n_heads):
        lo, hi = hh * head_dim, (hh + 1) * head_dim
        h_h = h[:, lo:hi]
        a_src = jnp.sum(h_h * params["att_src"][:, lo:hi], axis=1, keepdims=True)
        a_dst = jnp.sum(h_h * params["att_dst"][:, lo:hi], axis=1, keepdims=True)
        e = a_dst + a_src.T
        e = jnp.where(e > 0, e, 0.2 * e)
        e = jnp.where(adj_sl > 0, e, NEG_INF)
        p = jnp.exp(e - e.max(axis=1, keepdims=True))
        att = p / p.sum(axis=1, keepdims=True)
        outs.append(att @ h_h + params["bias"][:, lo:hi])
    x_out = jnp.concatenate(outs, axis=1)

    agg = adj @ x_out
    score = agg @ params["w_rel"] + params["b_rel"] + x_out @ params["w_root"]
    masked = jnp.where(onehot > 0, score.T, NEG_INF)
    gmax = masked.max(axis=1, keepdims=True)
    node_max = onehot.T @ gmax
    ex = jnp.exp(score - node_max)
    node_sum = onehot.T @ (onehot @ ex)
    soft = ex / node_sum
    emb = onehot @ (x_out * soft)
    return x_out, emb


if __name__ == "__main__":
    # Small deterministic problem: 2 graphs x 8 nodes, bidirectional ring edges per graph.
    N, F_IN, N_HEADS, HEAD_DIM, B = 16, 8, 2, 8, 2
    HC = N_HEADS * HEAD_DIM
    TILE_M = 8                     # 2 row tiles -> exercises the grid / pipelining

    src, dst = [], []
    for g in range(B):
        base = g * 8
        for k in range(8):
            a, b = base + k, base + (k + 1) % 8
            src += [a, b]
            dst += [b, a]
    edge_index = np.array([src, dst], dtype=np.int32)            # [2, E], E = 32

    adj_np = np.zeros((N, N), np.float32)
    adj_np[edge_index[1], edge_index[0]] = 1.0                   # adj[i, j] = 1 iff edge j -> i
    adj = jnp.asarray(adj_np)                                    # no self loops

    batch = np.array([0] * 8 + [1] * 8, dtype=np.int32)
    onehot_t_np = np.zeros((N, B), np.float32)
    onehot_t_np[np.arange(N), batch] = 1.0
    onehot_t = jnp.asarray(onehot_t_np)

    key = jax.random.PRNGKey(0)
    kx, *ks = jax.random.split(key, 8)
    x = jax.random.normal(kx, (N, F_IN), dtype=jnp.float32)
    params = {
        "w_gat":   jax.random.normal(ks[0], (F_IN, HC), dtype=jnp.float32) * 0.3,  # GATConv lin (no bias)
        "att_src": jax.random.normal(ks[1], (1, HC), dtype=jnp.float32) * 0.3,     # per-head att vecs
        "att_dst": jax.random.normal(ks[2], (1, HC), dtype=jnp.float32) * 0.3,
        "bias":    jax.random.normal(ks[3], (1, HC), dtype=jnp.float32) * 0.1,     # GATConv output bias
        "w_rel":   jax.random.normal(ks[4], (HC, 1), dtype=jnp.float32) * 0.3,     # SAGPooling GraphConv lin_rel
        "w_root":  jax.random.normal(ks[5], (HC, 1), dtype=jnp.float32) * 0.3,     # SAGPooling GraphConv lin_root
        "b_rel":   jax.random.normal(ks[6], (1, 1), dtype=jnp.float32) * 0.1,
    }

    x_out, emb = gat_block_pallas(x, adj, onehot_t, params, N_HEADS, HEAD_DIM, tile_m=TILE_M)
    jax.block_until_ready((x_out, emb))

    x_ref_v, emb_ref_v = gat_block_reference(x, adj, onehot_t, params, N_HEADS, HEAD_DIM)
    # Tolerance covers the bf16 operands on the MXU paths (att @ h, adj @ sr); mask/softmax math is f32.
    np.testing.assert_allclose(np.asarray(x_out), np.asarray(x_ref_v), rtol=3e-2, atol=3e-2)
    np.testing.assert_allclose(np.asarray(emb), np.asarray(emb_ref_v), rtol=3e-2, atol=3e-2)

    assert x_out.shape == (N, HC) and emb.shape == (B, HC)
    print("KERNEL_OK")
</pallas_src>

<mosaic_0001>
module attributes {stable_mosaic.version = 11 : i64} {
  func.func @feature_kernel(%arg0: i32, %arg1: memref<8x8xf32, #tpu.memory_space<vmem>>, %arg2: memref<8x16xf32, #tpu.memory_space<vmem>>, %arg3: memref<8x16xf32, #tpu.memory_space<vmem>>) attributes {dimension_semantics = [#tpu.dimension_semantics<parallel>], iteration_bounds = array<i64: 2>, scalar_prefetch = 0 : i64, scratch_operands = 0 : i64, tpu.core_type = #tpu.core_type<tc>, window_params = [{transform_indices = @transform_0, window_bounds = array<i64: 8, 8>}, {pipeline_mode = #tpu.pipeline_mode<synchronous>, transform_indices = @transform_1, window_bounds = array<i64: 8, 16>}, {transform_indices = @transform_2, window_bounds = array<i64: 8, 16>}]} {
    %c0 = arith.constant 0 : index
    %c0_0 = arith.constant 0 : index
    %0 = vector.load %arg1[%c0, %c0_0] : memref<8x8xf32, #tpu.memory_space<vmem>>, vector<8x8xf32>
    %c0_1 = arith.constant 0 : index
    %c0_2 = arith.constant 0 : index
    %1 = vector.load %arg2[%c0_1, %c0_2] : memref<8x16xf32, #tpu.memory_space<vmem>>, vector<8x16xf32>
    %cst = arith.constant dense<0.000000e+00> : vector<8x16xf32>
    %2 = tpu.matmul %0, %1, %cst {dimension_numbers = #tpu.dot_dimension_numbers<[1], [0], [0], [1], [0, 0, 1, 1], [], []>} : vector<8x8xf32>, vector<8x16xf32>, vector<8x16xf32> -> vector<8x16xf32>
    %c0_3 = arith.constant 0 : index
    %c0_4 = arith.constant 0 : index
    %3 = vector.load %arg3[%c0_3, %c0_4] : memref<8x16xf32, #tpu.memory_space<vmem>>, vector<8x16xf32>
    tpu.vector_store %arg3[%c0_3, %c0_4], %2 {strides = array<i32>} : memref<8x16xf32, #tpu.memory_space<vmem>>, vector<8x16xf32>,
    return
  }
  func.func @transform_0(%arg0: i32) -> (i32, i32) {
    %c0_i32 = arith.constant 0 : i32
    %c0_i32_0 = arith.constant 0 : i32
    return %arg0, %c0_i32 : i32, i32
  }
  func.func @transform_1(%arg0: i32) -> (i32, i32) {
    %c0_i32 = arith.constant 0 : i32
    %c0_i32_0 = arith.constant 0 : i32
    %c0_i32_1 = arith.constant 0 : i32
    return %c0_i32, %c0_i32_0 : i32, i32
  }
  func.func @transform_2(%arg0: i32) -> (i32, i32) {
    %c0_i32 = arith.constant 0 : i32
    %c0_i32_0 = arith.constant 0 : i32
    return %arg0, %c0_i32 : i32, i32
  }
}

</mosaic_0001>

<llo_original>
// kernel: tpu_custom_call.1
$region0: #{tpu_custom_call.1}
  #allocation0 [shape = 'u32[]', space=smem, size = 0x4, offset = 0x4, fixed_abs, tag = 'smem constant byte address 0x4 - core index']
  #allocation1 [shape = 'u32[144,128]{1,0:T(1,128)}', space=vmem, size = 0x12000, scoped, tag = 'internal scratch']
  %s0 = inlined_call_operand.vmem [shape: f32[16,8], index: 0, kind: input, shape index: {}]
  %s1 = inlined_call_operand.vmem [shape: f32[8,16], index: 1, kind: input, shape index: {}]
  %s2 = inlined_call_operand.hbm [shape: f32[16,16], index: 2, kind: output, shape index: {}]
  %s3 = sld [smem:[#allocation0]]
  $region41: #{tpu_custom_call.1} parent=0
    _
  %s5 = ssub.s32 1, %s3
  %s6 = scalar_select 0, %s5, %s3
  $region1: #{tpu_custom_call.1} parent=0
    #allocation2 [shape = 'u8[8192]{0}', space=vmem, size = 0x2000, scoped, tag = 'output window, operand 0']
    #allocation3 [shape = 's32[2]{0}', space=sflag, size = 0x8, scoped, tag = 'scoped memory for tpu_custom_call.1']
    %7 = vsyncpa [#allocation3], 0
    %s8 = scalar_lea.sflag [#allocation3], 1
    %9 = vsyncpa %s8, 0
    loop: start=0, step=1, limit=4
    $region2: #{tpu_custom_call.1} parent=1 // loop_pre_header
      _
    $region3: #{tpu_custom_call.1} parent=1 // loop_header
      %s11 = sphi 0, %s15
      %p12 = scmp.ge.s32.totalorder %s11, 4
      %s21 = sphi 0, %s23
      %s24 = sphi 0, %s21
      %s25 = sphi 0, %s24
      %s41 = sphi 0, %s25
      %s45 = sphi 0, %s45
      %s47 = sphi 0, %s45
      %s48 = sphi 0, %s47
      %s62 = sphi 0, %s48
      %s68 = sphi 0, %s70
      %s71 = sphi 0, %s68
      %s72 = sphi 0, %s71
      %s88 = sphi 0, %s72
    $region4: #{tpu_custom_call.1} parent=1 // loop_header_branch
      %14 = sbr.rel (%p12) target = $region8
    $region5: #{tpu_custom_call.1} parent=1 // loop_body
      %s16 = ssub.s32 %s11, 1
      %s17 = ssub.s32 %s11, 2
      %s18 = sadd.s32 %s11, 1
      %s19 = ssub.s32 %s11, %s18
      %p20 = scmp.eq.s32.totalorder %s19, 0
      %s22 = sadd.s32 %s21, 1
      %s23 = scalar_select %p20, %s21, %s22
      %p26 = pneg %p20
      %p27 = scmp.eq.s32.totalorder %s11, 1
      %p28 = por %p26, %p27
      %p29 = scmp.ne.s32.totalorder %s21, %s24
      %p30 = scmp.eq.s32.totalorder %s11, 0
      %p31 = por %p29, %p30
      %p32 = scmp.ne.s32.totalorder %s21, %s24
      %p33 = scmp.eq.s32.totalorder %s16, 1
      %p34 = por %p32, %p33
      %p35 = scmp.ne.s32.totalorder %s24, %s25
      %p36 = scmp.eq.s32.totalorder %s16, 0
      %p37 = por %p35, %p36
      %p38 = scmp.ne.s32.totalorder %s24, %s25
      %p39 = scmp.eq.s32.totalorder %s17, 1
      %p40 = por %p38, %p39
      %p42 = scmp.ne.s32.totalorder %s25, %s41
      %p43 = scmp.eq.s32.totalorder %s17, 0
      %p44 = por %p42, %p43
      %s46 = sadd.s32 %s45, 1
      %p49 = scmp.eq.s32.totalorder %s11, 1
      %p50 = scmp.ne.s32.totalorder %s45, %s47
      %p51 = scmp.eq.s32.totalorder %s11, 0
      %p52 = por %p50, %p51
      %p53 = scmp.ne.s32.totalorder %s45, %s47
      %p54 = scmp.eq.s32.totalorder %s16, 1
      %p55 = por %p53, %p54
      %p56 = scmp.ne.s32.totalorder %s47, %s48
      %p57 = scmp.eq.s32.totalorder %s16, 0
      %p58 = por %p56, %p57
      %p59 = scmp.ne.s32.totalorder %s47, %s48
      %p60 = scmp.eq.s32.totalorder %s17, 1
      %p61 = por %p59, %p60
      %p63 = scmp.ne.s32.totalorder %s48, %s62
      %p64 = scmp.eq.s32.totalorder %s17, 0
      %p65 = por %p63, %p64
      %s66 = ssub.s32 %s11, %s18
      %p67 = scmp.eq.s32.totalorder %s66, 0
      %s69 = sadd.s32 %s68, 1
      %s70 = scalar_select %p67, %s68, %s69
      %p73 = pneg %p67
      %p74 = scmp.eq.s32.totalorder %s11, 1
      %p75 = por %p73, %p74
      %p76 = scmp.ne.s32.totalorder %s68, %s71
      %p77 = scmp.eq.s32.totalorder %s11, 0
      %p78 = por %p76, %p77
      %p79 = scmp.ne.s32.totalorder %s68, %s71
      %p80 = scmp.eq.s32.totalorder %s16, 1
      %p81 = por %p79, %p80
      %p82 = scmp.ne.s32.totalorder %s71, %s72
      %p83 = scmp.eq.s32.totalorder %s16, 0
      %p84 = por %p82, %p83
      %p85 = scmp.ne.s32.totalorder %s71, %s72
      %p86 = scmp.eq.s32.totalorder %s17, 1
      %p87 = por %p85, %p86
      %p89 = scmp.ne.s32.totalorder %s72, %s88
      %p90 = scmp.eq.s32.totalorder %s17, 0
      %p91 = por %p89, %p90
      %p92 = scmp.le.s32.totalorder 1, %s11
      %p93 = scmp.lt.s32.totalorder %s11, 3
      %p94 = pnand %p92, %p93
      %p95 = pneg %p94
      // Predicated region
      $region9: #{tpu_custom_call.1} parent=5 // pred_check
        _
      $region10: #{tpu_custom_call.1} parent=5 // pred_check_branch
        %97 = sbr.rel (%p94) target = $region12
      $region11: #{tpu_custom_call.1} parent=5 // pred_region
        %s98 = ssub.s32 %s11, 1
        // Predicated region
        $region13: #{tpu_custom_call.1} parent=11 // pred_check
          %p99 = pneg %p58
        $region14: #{tpu_custom_call.1} parent=11 // pred_check_branch
          %101 = sbr.rel (%p99) target = $region16
        $region15: #{tpu_custom_call.1} parent=11 // pred_region
          _
        $region16: #{tpu_custom_call.1} parent=11 // pred_fallthru
          _
      $region12: #{tpu_custom_call.1} parent=5 // pred_fallthru
        _
      %p102 = scmp.lt.s32.totalorder %s11, 2
      // Predicated region
      $region17: #{tpu_custom_call.1} parent=5 // pred_check
        %p103 = pneg %p102
      $region18: #{tpu_custom_call.1} parent=5 // pred_check_branch
        %105 = sbr.rel (%p103) target = $region20
      $region19: #{tpu_custom_call.1} parent=5 // pred_region
        // Predicated region
        $region21: #{tpu_custom_call.1} parent=19 // pred_check
          %p106 = pneg %p31
        $region22: #{tpu_custom_call.1} parent=19 // pred_check_branch
          %108 = sbr.rel (%p106) target = $region24
        $region23: #{tpu_custom_call.1} parent=19 // pred_region
          %p109 = scmp.lt.s32.totalorder %s11, 1
          %s110 = scalar_select %p109, %s11, 1
          %s111 = smul.addr %s110, 8
          %s112 = scalar_lea.vmem %s0, %s111
        $region24: #{tpu_custom_call.1} parent=19 // pred_fallthru
          _
      $region20: #{tpu_custom_call.1} parent=5 // pred_fallthru
        _
      %p113 = scmp.le.s32.totalorder 1, %s11
      %p114 = scmp.lt.s32.totalorder %s11, 3
      %p115 = pnand %p113, %p114
      %p116 = pneg %p115
      // Predicated region
      $region25: #{tpu_custom_call.1} parent=5 // pred_check
        _
      $region26: #{tpu_custom_call.1} parent=5 // pred_check_branch
        %118 = sbr.rel (%p115) target = $region28
      $region27: #{tpu_custom_call.1} parent=5 // pred_region
        %s119 = ssub.s32 %s11, 1
        %p120 = scmp.lt.s32.totalorder %s16, 1
        %s121 = scalar_select %p120, %s16, 1
        %s122 = smul.addr %s121, 8
        %s123 = scalar_lea.vmem %s0, %s122
        %p124 = pneg %p37
        %p125 = pneg %p34
        %p126 = pneg %p58
        %p127 = pneg %p55
        %p128 = pneg %p84
        %p129 = pneg %p81
        %s130 = sand.u32 %s71, 1
        %s131 = scalar_lea.sflag [#allocation3], %s130
        %s132 = sand.u32 %s71, 1
        %s133 = smul.addr %s132, 8
        %s134 = scalar_lea.vmem [#allocation2], %s133
        %p135 = scmp.lt.s32.totalorder %s16, 1
        %s136 = scalar_select %p135, %s16, 1
        %s137 = smul.addr %s136, 8
        %s138 = scalar_lea.vmem %s0, %s137
        %v139 = vld [vmem:[%s138] sm:$0xff]
        %v140 = vld [vmem:[%s1] sm:$0xff]
        %vm141 = vcmask 64512
        %v143 = vsel %vm141, %v139, 0
        %145 = vmatprep.subr.mxu0 0.0
        %146 = vmatpush1.msra.mxu0 0.0
        %147 = vmatprep.subr.mxu0 0.0
        %148 = vmatpush1.msra.mxu0 0.0
        %149 = vmatprep.subr.mxu0 0.0
        %150 = vmatpush1.msra.mxu0 0.0
        %151 = vmatprep.subr.mxu0 0.0
        %152 = vmatpush1.msra.mxu0 0.0
        %153 = vmatprep.subr.mxu0 0.0
        %154 = vmatpush1.msra.mxu0 0.0
        %155 = vmatprep.subr.mxu0 0.0
        %156 = vmatpush1.msra.mxu0 0.0
        %157 = vmatprep.subr.mxu0 0.0
        %158 = vmatpush1.msra.mxu0 0.0
        %159 = vmatprep.subr.mxu0 0.0
        %160 = vmatpush1.msra.mxu0 0.0
        %161 = vmatprep.subr.mxu0 0.0
        %162 = vmatpush1.msra.mxu0 0.0
        %163 = vmatprep.subr.mxu0 0.0
        %164 = vmatpush1.msra.mxu0 0.0
        %165 = vmatprep.subr.mxu0 0.0
        %166 = vmatpush1.msra.mxu0 0.0
        %167 = vmatprep.subr.mxu0 0.0
        %168 = vmatpush1.msra.mxu0 0.0
        %169 = vmatprep.subr.mxu0 0.0
        %170 = vmatpush1.msra.mxu0 0.0
        %171 = vmatprep.subr.mxu0 0.0
        %172 = vmatpush1.msra.mxu0 0.0
        %173 = vmatprep.subr.mxu0 0.0
        %174 = vmatpush1.msra.mxu0 0.0
        %175 = vmatprep.subr.mxu0 0.0
        %176 = vmatpush1.msra.mxu0 %v140
        %177 = vmatprep.subr.mxu0 0.0
        %178 = vmatpush2.msra.mxu0 0.0
        %179 = vmatprep.subr.mxu0 0.0
        %180 = vmatpush2.msra.mxu0 0.0
        %181 = vmatprep.subr.mxu0 0.0
        %182 = vmatpush2.msra.mxu0 0.0
        %183 = vmatprep.subr.mxu0 0.0
        %184 = vmatpush2.msra.mxu0 0.0
        %185 = vmatprep.subr.mxu0 0.0
        %186 = vmatpush2.msra.mxu0 0.0
        %187 = vmatprep.subr.mxu0 0.0
        %188 = vmatpush2.msra.mxu0 0.0
        %189 = vmatprep.subr.mxu0 0.0
        %190 = vmatpush2.msra.mxu0 0.0
        %191 = vmatprep.subr.mxu0 0.0
        %192 = vmatpush2.msra.mxu0 0.0
        %193 = vmatprep.subr.mxu0 0.0
        %194 = vmatpush2.msra.mxu0 0.0
        %195 = vmatprep.subr.mxu0 0.0
        %196 = vmatpush2.msra.mxu0 0.0
        %197 = vmatprep.subr.mxu0 0.0
        %198 = vmatpush2.msra.mxu0 0.0
        %199 = vmatprep.subr.mxu0 0.0
        %200 = vmatpush2.msra.mxu0 0.0
        %201 = vmatprep.subr.mxu0 0.0
        %202 = vmatpush2.msra.mxu0 0.0
        %203 = vmatprep.subr.mxu0 0.0
        %204 = vmatpush2.msra.mxu0 0.0
        %205 = vmatprep.subr.mxu0 0.0
        %206 = vmatpush2.msra.mxu0 0.0
        %207 = vmatprep.subr.mxu0 0.0
        %208 = vmatpush2.msra.mxu0 0.0
        %209 = vmatprep.mubr.f32.mxu0 0.0
        %210 = vmatmul.mubr.f32.gmra.mxu0 %v143
        %v211 = vpop.f32.mrf.mxu0
        %v212 = vadd.f32 0.0, %v211
        %v213 = vpop.f32.mrf.mxu0
        %214 = vdwg.mxu0
        %vm215 = vcmask 130048
        %216 = vst.msk [vmem:[%s134] sm:$0xff] %vm215, %v212
        %s217 = sand.u32 %s71, 1
        %s218 = scalar_lea.sflag [#allocation3], %s217
        %s219 = sand.u32 %s71, 1
        %s220 = smul.addr %s219, 8
        %s221 = scalar_lea.vmem [#allocation2], %s220
        // Predicated region
        $region29: #{tpu_custom_call.1} parent=27 // pred_check
          %p222 = pneg %p81
        $region30: #{tpu_custom_call.1} parent=27 // pred_check_branch
          %224 = sbr.rel (%p222) target = $region32
        $region31: #{tpu_custom_call.1} parent=27 // pred_region
          %s226 = ssub.s32 128, 128
          %227 = vsyncadd %s218, %s226
          %s228 = smul.addr %s16, 128
          %s229 = scalar_lea.hbm %s2, %s228
          %s231 = sshll.u32 %s221, 4
          %s232 = int_to_ptr.vmem [resolvable:$true] %s231
          %234 = dma.vmem_to_hbm [thread:$0]  %s232, 128, %s229, %s218
        $region32: #{tpu_custom_call.1} parent=27 // pred_fallthru
          _
      $region28: #{tpu_custom_call.1} parent=5 // pred_fallthru
        _
      %p235 = scmp.le.s32.totalorder 2, %s11
      // Predicated region
      $region33: #{tpu_custom_call.1} parent=5 // pred_check
        %p236 = pneg %p235
      $region34: #{tpu_custom_call.1} parent=5 // pred_check_branch
        %238 = sbr.rel (%p236) target = $region36
      $region35: #{tpu_custom_call.1} parent=5 // pred_region
        %s239 = ssub.s32 %s11, 2
        // Predicated region
        $region37: #{tpu_custom_call.1} parent=35 // pred_check
          %p240 = pneg %p87
        $region38: #{tpu_custom_call.1} parent=35 // pred_check_branch
          %242 = sbr.rel (%p240) target = $region40
        $region39: #{tpu_custom_call.1} parent=35 // pred_region
          %s243 = sand.u32 %s72, 1
          %s244 = scalar_lea.sflag [#allocation3], %s243
          %s245 = sand.u32 %s72, 1
          %s246 = smul.addr %s245, 8
          %s247 = scalar_lea.vmem [#allocation2], %s246
          %248 = dma.done %s244, 128
        $region40: #{tpu_custom_call.1} parent=35 // pred_fallthru
          _
      $region36: #{tpu_custom_call.1} parent=5 // pred_fallthru
        _
    $region6: #{tpu_custom_call.1} parent=1 // loop_footer
      %s15 = sadd.s32 1, %s11
    $region7: #{tpu_custom_call.1} parent=1 // loop_footer_branch
      %10 = sbr.rel target = $region3
    $region8: #{tpu_custom_call.1} parent=1 // loop_exit
      _
    %249 = vsyncpa [#allocation3], 1
    %s250 = scalar_lea.sflag [#allocation3], 1
    %251 = vsyncpa %s250, 1

</llo_original>
